<compile_context>
chip_gen: v6e
topology: v6e:2x2x1
jax: 0.10.0
libtpu: 0.0.40
codegen_flags: <defaults>
</compile_context>

<pallas_src>
import functools
import math

import jax
import jax.numpy as jnp
from jax.experimental import pallas as pl
from jax.experimental.pallas import tpu as pltpu


_L_CANDIDATES = (2048, 1024, 512, 256, 128)


def _dc_kernel(k_ref, k0_ref, m_ref, o_ref, *, coef, mask_is_bool, compute_dtype):
    """out = k + (mask * coef) * (k0 - k); coef is a compile-time constant."""
    k = k_ref[...].astype(compute_dtype)
    k0 = k0_ref[...].astype(compute_dtype)
    if mask_is_bool:
        m = m_ref[...]
        if coef == 1.0:
            out = jnp.where(m, k0, k)
        else:
            c = jnp.asarray(coef, dtype=compute_dtype)
            out = jnp.where(m, k + c * (k0 - k), k)
    else:
        m = m_ref[...].astype(compute_dtype)
        if coef == 1.0:
            out = k + m * (k0 - k)
        else:
            c = jnp.asarray(coef, dtype=compute_dtype)
            out = k + (m * c) * (k0 - k)
    o_ref[...] = out.astype(o_ref.dtype)


def _sublane_align(dtype) -> int:
    """Packed-dtype sublane multiple: f32 -> 8, bf16 -> 16, int8/bool -> 32."""
    itemsize = jnp.dtype(dtype).itemsize
    return max(8, 32 // max(1, itemsize))


def _largest_aligned_divisor(x, limit, align):
    """Largest d with d % align == 0, d | x, d <= limit (None if none)."""
    limit = min(limit, x)
    best = None
    d = align
    while d <= limit:
        if x % d == 0:
            best = d
        d += align
    return best


def _broadcast_period(k_shape, m_shape):
    """If mask == (1,..,1, *k_shape[s:]) (broadcast over leading dims only),
    return prod(k_shape[s:]) — the repeat period in flat row-major order."""
    nd = len(k_shape)
    if len(m_shape) > nd:
        return None
    m = (1,) * (nd - len(m_shape)) + tuple(m_shape)
    s = nd
    while s > 0 and m[s - 1] == k_shape[s - 1]:
        s -= 1
    if any(d != 1 for d in m[:s]):
        return None
    return int(math.prod(k_shape[s:])) if s < nd else 1


def _chip_budget():
    """(per-grid-step byte budget across all live tiles, explicit vmem limit)."""
    try:
        kind = jax.devices()[0].device_kind.lower()
    except Exception:  # pragma: no cover - defensive
        kind = ""
    if "v5 lite" in kind or "v5e" in kind or "v5litepod" in kind:
        # v5e: 16 MiB default scoped VMEM; ~1 MiB/array, keep the default limit.
        return 4 << 20, None
    # v6e / v7x: ~3 MiB/array amortizes the ~0.35 us per-step overhead.
    # 4 tiles x 2 (double buffer) x ~3 MiB ~= 24 MiB << 48 MiB explicit limit
    # (v7x physical VMEM is 64 MiB, v6e 128 MiB).
    return 12 << 20, 48 << 20


def data_consistency_ref(k, k0, mask, noise_lvl=None):
    """Pure-JAX reference mirroring the PyTorch function exactly."""
    v = noise_lvl
    if v:
        return (1 - mask) * k + mask * (k + v * k0) / (1 + v)
    return (1 - mask) * k + mask * k0


def data_consistency_pallas(k, k0, mask, noise_lvl=None, *, donate_k=False):
    """Pallas implementation of data_consistency / DataConsistencyLayer.forward.

    k, k0:     identical-shape real arrays (e.g. NCHW).
    mask:      same shape as k, or broadcastable over leading dims
               (e.g. (H, W) / (1, 1, H, W)); bool / int / float.
    noise_lvl: static Python scalar or None (module attribute). Falsy values
               mean hard replacement, matching the PyTorch `if v:` convention.
    donate_k:  alias the output onto k's (reshaped) buffer (iterative recon).
    """
    assert k.shape == k0.shape, "k and k0 must have the same shape"
    # TODO(synk): complex64 k-space should be viewed as two real channels
    # (trailing dim of 2) before calling this real-valued kernel.
    assert not jnp.issubdtype(k.dtype, jnp.complexfloating), "real dtypes only"
    # TODO(synk): a traced/runtime noise_lvl would need an SMEM scalar; the
    # module stores it as a static attribute, so a Python scalar is assumed.
    if noise_lvl:
        v = float(noise_lvl)
        coef = v / (1.0 + v)
    else:
        coef = 1.0

    out_dtype = jnp.result_type(k.dtype, k0.dtype)
    compute_dtype = jnp.promote_types(out_dtype, jnp.float32)
    mask_is_bool = mask.dtype == jnp.bool_

    orig_shape = k.shape
    n = int(k.size)

    step_budget, vmem_limit = _chip_budget()
    k_isz = jnp.dtype(k.dtype).itemsize
    k0_isz = jnp.dtype(k0.dtype).itemsize
    o_isz = jnp.dtype(out_dtype).itemsize
    m_isz = jnp.dtype(mask.dtype).itemsize
    bytes_per_elem = k_isz + k0_isz + o_isz + m_isz
    align = max(_sublane_align(k.dtype), _sublane_align(k0.dtype),
                _sublane_align(out_dtype), _sublane_align(mask.dtype))

    # ---- Mode A: reuse the small mask via its own index_map ----------------
    period = None
    if mask.shape != k.shape:
        period = _broadcast_period(k.shape, mask.shape)

    mode_a = None  # (L, mask_rows, tile_rows)
    if period is not None and 0 < period < n:
        best = None
        for c in _L_CANDIDATES:
            if period % c:
                continue
            mask_rows = period // c
            budget_rows = max(8, step_budget // (c * bytes_per_elem))
            t = _largest_aligned_divisor(mask_rows, budget_rows, align)
            if t is None:
                t = _largest_aligned_divisor(mask_rows, budget_rows, 8)
            if t is None:
                continue
            score = t * c  # elements per grid step
            if best is None or score > best[0] or (score == best[0] and c > best[1]):
                best = (score, c, mask_rows, t)
        if best is not None:
            _, L, mask_rows, tile_rows = best
            mode_a = (L, mask_rows, tile_rows)

    if mode_a is not None:
        L, mask_rows, tile_rows = mode_a
        rows = n // L
        blocks_per_mask = mask_rows // tile_rows
        grid = (rows // tile_rows,)  # exact: tile_rows | mask_rows | rows
        k2 = k.reshape(rows, L)
        k02 = k0.reshape(rows, L)
        m2 = mask.reshape(mask_rows, L)
        kspec = pl.BlockSpec((tile_rows, L), lambda i: (i, 0))
        mspec = pl.BlockSpec((tile_rows, L), lambda i: (i % blocks_per_mask, 0))
        in_specs = [kspec, kspec, mspec]
        out_spec = kspec
    else:
        # ---- Mode B: full-size mask, lane-dense (rows, L) flattening --------
        divisors = [c for c in _L_CANDIDATES if n % c == 0]
        if not divisors:
            # TODO(synk): element count not divisible by 128 (never happens for
            # power-of-two k-space grids); plain XLA avoids the 2x-traffic pad.
            return jnp.asarray(
                data_consistency_ref(k, k0, mask, noise_lvl), out_dtype)
        if mask.shape != k.shape:
            # TODO(synk): non-trailing broadcast patterns still materialize.
            mask = jnp.broadcast_to(mask, k.shape)
        # Largest L that still leaves >= 8 rows (else largest divisor).
        L = next((c for c in divisors if n // c >= 8), divisors[0])
        rows = n // L
        per_row = L * bytes_per_elem
        budget_rows = max(align, (step_budget // per_row) // align * align)
        tile_rows = budget_rows
        # Keep >= 4 grid steps on mid-sized inputs (pipelining + v7x 2 cores).
        if rows // 4 >= align:
            tile_rows = min(tile_rows, (rows // 4 // align) * align)
        if tile_rows >= rows:
            tile_rows = rows  # single full-extent block is legal
        grid = (pl.cdiv(rows, tile_rows),)  # partial last block is masked
        k2 = k.reshape(rows, L)
        k02 = k0.reshape(rows, L)
        m2 = mask.reshape(rows, L)
        spec = pl.BlockSpec((tile_rows, L), lambda i: (i, 0))
        in_specs = [spec, spec, spec]
        out_spec = spec

    kernel = functools.partial(_dc_kernel, coef=coef, mask_is_bool=mask_is_bool,
                               compute_dtype=compute_dtype)

    bytes_accessed = int(k2.nbytes) + int(k02.nbytes) + int(m2.nbytes) + n * o_isz
    cost = pl.CostEstimate(flops=3 * n, transcendentals=0,
                           bytes_accessed=bytes_accessed)
    alias = {0: 0} if (donate_k and k2.dtype == out_dtype) else {}

    out2 = pl.pallas_call(
        kernel,
        out_shape=jax.ShapeDtypeStruct((rows, L), out_dtype),
        grid_spec=pltpu.PrefetchScalarGridSpec(
            num_scalar_prefetch=0,
            grid=grid,
            in_specs=in_specs,
            out_specs=out_spec,
        ),
        compiler_params=pltpu.CompilerParams(
            dimension_semantics=("parallel",),
            vmem_limit_bytes=vmem_limit,
        ),
        cost_estimate=cost,
        input_output_aliases=alias,
    )(k2, k02, m2)

    return out2.reshape(orig_shape)


if __name__ == "__main__":
    key = jax.random.PRNGKey(0)
    k_key, k0_key, m_key, k_key2, k0_key2, m_key2 = jax.random.split(key, 6)

    # --- Full-shape mask (Mode B), NCHW k-space-like tensors -----------------
    N, C, H, W = 2, 4, 16, 16
    k = jax.random.normal(k_key, (N, C, H, W), dtype=jnp.float32)
    k0 = jax.random.normal(k0_key, (N, C, H, W), dtype=jnp.float32)
    mask_bool = jax.random.uniform(m_key, (N, C, H, W)) > 0.5
    mask_f32 = mask_bool.astype(jnp.float32)

    ref = data_consistency_ref(k, k0, mask_f32, None)
    ref_n = data_consistency_ref(k, k0, mask_f32, 0.1)

    out = jax.block_until_ready(data_consistency_pallas(k, k0, mask_bool, None))
    assert jnp.allclose(out, ref, atol=1e-6), "mismatch (noise=None, bool mask)"

    out_n = jax.block_until_ready(data_consistency_pallas(k, k0, mask_bool, 0.1))
    assert jnp.allclose(out_n, ref_n, atol=1e-5), "mismatch (noise=0.1, bool mask)"

    out_f = jax.block_until_ready(data_consistency_pallas(k, k0, mask_f32, None))
    assert jnp.allclose(out_f, ref, atol=1e-5), "mismatch (float mask)"

    out_z = jax.block_until_ready(data_consistency_pallas(k, k0, mask_bool, 0.0))
    assert jnp.allclose(out_z, ref, atol=1e-6), "mismatch (noise=0.0 == None)"

    # --- Small (1,1,H,W) mask reused via index_map (Mode A) ------------------
    N2, C2, H2, W2 = 2, 4, 32, 32
    k_b = jax.random.normal(k_key2, (N2, C2, H2, W2), dtype=jnp.float32)
    k0_b = jax.random.normal(k0_key2, (N2, C2, H2, W2), dtype=jnp.float32)
    small_bool = jax.random.uniform(m_key2, (1, 1, H2, W2)) > 0.5
    small_f32 = small_bool.astype(jnp.float32)

    ref_b = data_consistency_ref(k_b, k0_b, small_f32, None)
    ref_bn = data_consistency_ref(k_b, k0_b, small_f32, 0.1)

    out_b = jax.block_until_ready(data_consistency_pallas(k_b, k0_b, small_bool, None))
    assert jnp.allclose(out_b, ref_b, atol=1e-6), "mismatch (small bool mask)"

    out_bn = jax.block_until_ready(data_consistency_pallas(k_b, k0_b, small_f32, 0.1))
    assert jnp.allclose(out_bn, ref_bn, atol=1e-5), "mismatch (small float mask, noise)"

    # --- Output aliased onto k (donate_k) -------------------------------------
    out_d = jax.block_until_ready(
        data_consistency_pallas(k, k0, mask_bool, None, donate_k=True))
    assert jnp.allclose(out_d, ref, atol=1e-6), "mismatch (donate_k)"

    print("KERNEL_OK")
</pallas_src>

<mosaic_0001>
module attributes {stable_mosaic.version = 11 : i64} {
  func.func @_dc_kernel(%arg0: i32, %arg1: memref<8x256xf32, #tpu.memory_space<vmem>>, %arg2: memref<8x256xf32, #tpu.memory_space<vmem>>, %arg3: memref<8x256xi32, #tpu.memory_space<vmem>>, %arg4: memref<8x256xf32, #tpu.memory_space<vmem>>) attributes {dimension_semantics = [#tpu.dimension_semantics<parallel>], iteration_bounds = array<i64: 1>, scalar_prefetch = 0 : i64, scratch_operands = 0 : i64, tpu.core_type = #tpu.core_type<tc>, window_params = [{transform_indices = @transform_0, window_bounds = array<i64: 8, 256>}, {transform_indices = @transform_1, window_bounds = array<i64: 8, 256>}, {transform_indices = @transform_2, window_bounds = array<i64: 8, 256>}, {transform_indices = @transform_3, window_bounds = array<i64: 8, 256>}]} {
    %c0 = arith.constant 0 : index
    %c0_0 = arith.constant 0 : index
    %0 = vector.load %arg1[%c0, %c0_0] : memref<8x256xf32, #tpu.memory_space<vmem>>, vector<8x256xf32>
    %c0_1 = arith.constant 0 : index
    %c0_2 = arith.constant 0 : index
    %1 = vector.load %arg2[%c0_1, %c0_2] : memref<8x256xf32, #tpu.memory_space<vmem>>, vector<8x256xf32>
    %c0_3 = arith.constant 0 : index
    %c0_4 = arith.constant 0 : index
    %2 = vector.load %arg3[%c0_3, %c0_4] : memref<8x256xi32, #tpu.memory_space<vmem>>, vector<8x256xi32>
    %cst = arith.constant dense<0> : vector<8x256xi32>
    %3 = arith.cmpi ne, %2, %cst : vector<8x256xi32>
    %4 = arith.select %3, %1, %0 : vector<8x256xi1>, vector<8x256xf32>
    %c0_5 = arith.constant 0 : index
    %c0_6 = arith.constant 0 : index
    %5 = vector.load %arg4[%c0_5, %c0_6] : memref<8x256xf32, #tpu.memory_space<vmem>>, vector<8x256xf32>
    tpu.vector_store %arg4[%c0_5, %c0_6], %4 {strides = array<i32>} : memref<8x256xf32, #tpu.memory_space<vmem>>, vector<8x256xf32>,
    return
  }
  func.func @transform_0(%arg0: i32) -> (i32, i32) {
    %c0_i32 = arith.constant 0 : i32
    %c0_i32_0 = arith.constant 0 : i32
    return %arg0, %c0_i32 : i32, i32
  }
  func.func @transform_1(%arg0: i32) -> (i32, i32) {
    %c0_i32 = arith.constant 0 : i32
    %c0_i32_0 = arith.constant 0 : i32
    return %arg0, %c0_i32 : i32, i32
  }
  func.func @transform_2(%arg0: i32) -> (i32, i32) {
    %c0_i32 = arith.constant 0 : i32
    %c0_i32_0 = arith.constant 0 : i32
    return %arg0, %c0_i32 : i32, i32
  }
  func.func @transform_3(%arg0: i32) -> (i32, i32) {
    %c0_i32 = arith.constant 0 : i32
    %c0_i32_0 = arith.constant 0 : i32
    return %arg0, %c0_i32 : i32, i32
  }
}

</mosaic_0001>

<llo_original>
// kernel: tpu_custom_call.1
$region0: #{tpu_custom_call.1}
  #allocation0 [shape = 'u32[]', space=smem, size = 0x4, offset = 0x4, fixed_abs, tag = 'smem constant byte address 0x4 - core index']
  #allocation1 [shape = 'u32[144,128]{1,0:T(1,128)}', space=vmem, size = 0x12000, scoped, tag = 'internal scratch']
  %s0 = inlined_call_operand.vmem [shape: f32[8,256], index: 0, kind: input, shape index: {}]
  %s1 = inlined_call_operand.hbm [shape: f32[8,256], index: 1, kind: input, shape index: {}]
  %s2 = inlined_call_operand.vmem [shape: s32[8,256], index: 2, kind: input, shape index: {}]
  %s3 = inlined_call_operand.hbm [shape: f32[8,256], index: 3, kind: output, shape index: {}]
  %s4 = sld [smem:[#allocation0]]
  $region26: #{tpu_custom_call.1} parent=0
    _
  %s6 = ssub.s32 1, %s4
  %s7 = scalar_select 0, %s6, %s4
  $region1: #{tpu_custom_call.1} parent=0
    #allocation2 [shape = 'u8[8192]{0}', space=vmem, size = 0x2000, scoped, tag = 'input window, operand 1, single buffered']
    #allocation3 [shape = 's32[1]{0}', space=sflag, size = 0x4, scoped, tag = 'scoped memory for tpu_custom_call.1']
    #allocation4 [shape = 's32[1]{0}', space=sflag, size = 0x4, scoped, tag = 'scoped memory for tpu_custom_call.1']
    #allocation5 [shape = 'u8[8192]{0}', space=vmem, size = 0x2000, scoped, tag = 'output window, operand 0, single buffered']
    %8 = vsyncpa [#allocation3], 0
    %9 = vsyncpa [#allocation4], 0
    // Predicated region
    $region2: #{tpu_custom_call.1} parent=1 // pred_check
      _
    $region3: #{tpu_custom_call.1} parent=1 // pred_check_branch
      %11 = sbr.rel (0) target = $region5
    $region4: #{tpu_custom_call.1} parent=1 // pred_region
      _
    $region5: #{tpu_custom_call.1} parent=1 // pred_fallthru
      _
    // Predicated region
    $region6: #{tpu_custom_call.1} parent=1 // pred_check
      _
    $region7: #{tpu_custom_call.1} parent=1 // pred_check_branch
      %13 = sbr.rel (0) target = $region9
    $region8: #{tpu_custom_call.1} parent=1 // pred_region
      %s15 = ssub.s32 256, 256
      %16 = vsyncadd [#allocation3], %s15
      %s18 = sshll.u32 [#allocation2], 4
      %s19 = int_to_ptr.vmem [resolvable:$true] %s18
      %21 = dma.hbm_to_vmem [thread:$0]  %s1, 256, %s19, [#allocation3]
    $region9: #{tpu_custom_call.1} parent=1 // pred_fallthru
      _
    // Predicated region
    $region10: #{tpu_custom_call.1} parent=1 // pred_check
      _
    $region11: #{tpu_custom_call.1} parent=1 // pred_check_branch
      %23 = sbr.rel (0) target = $region13
    $region12: #{tpu_custom_call.1} parent=1 // pred_region
      _
    $region13: #{tpu_custom_call.1} parent=1 // pred_fallthru
      _
    // Predicated region
    $region14: #{tpu_custom_call.1} parent=1 // pred_check
      _
    $region15: #{tpu_custom_call.1} parent=1 // pred_check_branch
      %25 = sbr.rel (0) target = $region17
    $region16: #{tpu_custom_call.1} parent=1 // pred_region
      %26 = dma.done [#allocation3], 256
    $region17: #{tpu_custom_call.1} parent=1 // pred_fallthru
      _
    %v27 = vld [vmem:[%s0] sm:$0xff]
    %v28 = vld [vmem:[%s0 + $0x8] sm:$0xff]
    %v29 = vld [vmem:[#allocation2] sm:$0xff]
    %v30 = vld [vmem:[#allocation2 + $0x8] sm:$0xff]
    %v31 = vld [vmem:[%s2] sm:$0xff]
    %v32 = vld [vmem:[%s2 + $0x8] sm:$0xff]
    %vm33 = vcmp.ne.s32.totalorder %v31, 0
    %vm34 = vcmp.ne.s32.totalorder %v32, 0
    %v35 = vsel %vm33, %v29, %v27
    %v36 = vsel %vm34, %v30, %v28
    %37 = vst [vmem:[#allocation5] sm:$0xff] %v35
    %38 = vst [vmem:[#allocation5 + $0x8] sm:$0xff] %v36
    // Predicated region
    $region18: #{tpu_custom_call.1} parent=1 // pred_check
      _
    $region19: #{tpu_custom_call.1} parent=1 // pred_check_branch
      %40 = sbr.rel (0) target = $region21
    $region20: #{tpu_custom_call.1} parent=1 // pred_region
      %s42 = ssub.s32 256, 256
      %43 = vsyncadd [#allocation4], %s42
      %s45 = sshll.u32 [#allocation5], 4
      %s46 = int_to_ptr.vmem [resolvable:$true] %s45
      %48 = dma.vmem_to_hbm [thread:$0]  %s46, 256, %s3, [#allocation4]
    $region21: #{tpu_custom_call.1} parent=1 // pred_fallthru
      _
    // Predicated region
    $region22: #{tpu_custom_call.1} parent=1 // pred_check
      _
    $region23: #{tpu_custom_call.1} parent=1 // pred_check_branch
      %50 = sbr.rel (0) target = $region25
    $region24: #{tpu_custom_call.1} parent=1 // pred_region
      %51 = dma.done [#allocation4], 256
    $region25: #{tpu_custom_call.1} parent=1 // pred_fallthru
      _
    %52 = vsyncpa [#allocation3], 1
    %53 = vsyncpa [#allocation4], 1

</llo_original>
